<compile_context>
chip_gen: v5e
topology: v5e:2x2
jax: 0.10.0
libtpu: 0.0.40
codegen_flags: <defaults>
</compile_context>

<pallas_src>
import jax
import jax.numpy as jnp
from jax.experimental import pallas as pl
from jax.experimental.pallas import tpu as pltpu

LANE = 128


def _round_up(n, m):
    return ((n + m - 1) // m) * m


def _device_kind():
    try:
        return jax.devices()[0].device_kind.lower()
    except Exception:
        return ""


def _tensorcores_per_chip():
    # v7x exposes 2 TensorCores behind one device; v5e/v6e have 1.
    kind = _device_kind()
    return 2 if "7" in kind else 1


def _has_bf16_vpu():
    # v6e / v7x have bf16 VPU+EUP; v5e does not.
    kind = _device_kind()
    return ("v6" in kind) or ("7" in kind)


def _pick_batch_tile(B, max_tile, num_cores):
    """Batch tile (multiple of 8 unless it covers B exactly).

    Single-TC chips (v5e/v6e): one tile covering B whenever it fits -- the
    grid is a purely sequential loop there, extra steps are pure overhead.
    2-TC chips (v7x): split into an even number of balanced tiles so both
    TensorCores get equal work on the "parallel" batch axis.
    """
    max_tile = max(8, (max_tile // 8) * 8)
    if B <= 8:
        return B
    if num_cores < 2:
        return B if B <= max_tile else max_tile
    if B <= 2 * max_tile:
        return min(_round_up(pl.cdiv(B, 2), 8), max_tile)
    steps = pl.cdiv(B, max_tile)
    if steps % 2:
        steps += 1
    return min(_round_up(pl.cdiv(B, steps), 8), max_tile)


def actor_mlp_kernel(x_ref, w1_ref, b1_ref, w2_ref, b2_ref, w3_ref, b3_ref,
                     o_ref):
    """Fused 3-layer tanh MLP forward on one batch tile.

    Matmuls run in the weights' dtype on the MXU with f32 accumulation; the
    bias-add + tanh run in the biases' dtype (bf16 on v6e/v7x, f32 on v5e).
    """
    mm_dtype = w1_ref.dtype
    act_dtype = b1_ref.dtype

    x = x_ref[...].astype(mm_dtype)          # cast in-kernel (hidden under DMA)

    h1 = jnp.dot(x, w1_ref[...], preferred_element_type=jnp.float32)
    h1 = jnp.tanh(h1.astype(act_dtype) + b1_ref[...])

    h2 = jnp.dot(h1.astype(mm_dtype), w2_ref[...],
                 preferred_element_type=jnp.float32)
    h2 = jnp.tanh(h2.astype(act_dtype) + b2_ref[...])

    mu = jnp.dot(h2.astype(mm_dtype), w3_ref[...],
                 preferred_element_type=jnp.float32)
    mu = jnp.tanh(mu.astype(act_dtype) + b3_ref[...])

    o_ref[...] = mu.astype(o_ref.dtype)


def prepare_model_actor_params(params, *, matmul_dtype=jnp.bfloat16,
                               bf16_activations=None):
    """One-time parameter prep (call ONCE, reuse for every forward call).

    Pads the hidden feature dim to a lane-dense multiple of 128 and casts
    weights to the MXU dtype.  Zero padding is numerically exact (tanh(0)=0
    and the padded rows of the next layer's weight are zero).  The action dim
    is NOT padded: the kernel writes the real (B, act_size) output directly.

    Weights must be stored transposed, i.e. (in_features, out_features);
    PyTorch nn.Linear stores (out, in), so transpose when loading a state_dict.
    """
    w1, b1, w2, b2, w3, b3 = params
    obs_size, hidden = w1.shape
    act_size = w3.shape[1]
    assert w2.shape == (hidden, hidden) and w3.shape[0] == hidden

    if bf16_activations is None:
        bf16_activations = _has_bf16_vpu()
    use_bf16_act = (jnp.dtype(matmul_dtype) == jnp.dtype(jnp.bfloat16)
                    and bf16_activations)
    act_dtype = jnp.bfloat16 if use_bf16_act else jnp.float32

    hid_p = _round_up(hidden, LANE)
    dh = hid_p - hidden

    w1p = jnp.pad(w1, ((0, 0), (0, dh))).astype(matmul_dtype)
    b1p = jnp.pad(b1, ((0, 0), (0, dh))).astype(act_dtype)
    w2p = jnp.pad(w2, ((0, dh), (0, dh))).astype(matmul_dtype)
    b2p = jnp.pad(b2, ((0, 0), (0, dh))).astype(act_dtype)
    w3p = jnp.pad(w3, ((0, dh), (0, 0))).astype(matmul_dtype)
    b3p = b3.astype(act_dtype)
    return (w1p, b1p, w2p, b2p, w3p, b3p)


def model_actor_forward(x, prepared_params, *, batch_tile=1024):
    """ModelActor.forward: x (B, obs_size) f32 -> mu (B, act_size) f32.

    `prepared_params` must come from prepare_model_actor_params().
    """
    w1, b1, w2, b2, w3, b3 = prepared_params
    B, obs_size = x.shape
    assert w1.shape[0] == obs_size
    hid_p = w1.shape[1]
    act_size = w3.shape[1]

    tile = _pick_batch_tile(B, batch_tile, _tensorcores_per_chip())
    grid = (pl.cdiv(B, tile),)

    nbytes = lambda a: a.size * a.dtype.itemsize
    cost = pl.CostEstimate(
        flops=2 * B * (obs_size * hid_p + hid_p * hid_p + hid_p * act_size),
        transcendentals=B * (2 * hid_p + act_size),
        bytes_accessed=(nbytes(x)
                        + sum(nbytes(p) for p in prepared_params)
                        + B * act_size * 4),
    )

    return pl.pallas_call(
        actor_mlp_kernel,
        out_shape=jax.ShapeDtypeStruct((B, act_size), jnp.float32),
        grid_spec=pl.GridSpec(
            grid=grid,
            in_specs=[
                # batch tile of the (f32) input
                pl.BlockSpec((tile, obs_size), lambda i: (i, 0)),
                # weights / biases: full arrays with constant index_maps =>
                # DMA'd once, VMEM-resident across all batch tiles.
                pl.BlockSpec((obs_size, hid_p), lambda i: (0, 0)),
                pl.BlockSpec((1, hid_p), lambda i: (0, 0)),
                pl.BlockSpec((hid_p, hid_p), lambda i: (0, 0)),
                pl.BlockSpec((1, hid_p), lambda i: (0, 0)),
                pl.BlockSpec((hid_p, act_size), lambda i: (0, 0)),
                pl.BlockSpec((1, act_size), lambda i: (0, 0)),
            ],
            # real (un-padded) output width: masked vst, but ~16x fewer bytes
            # and no padded-slab + slice round trip.
            out_specs=pl.BlockSpec((tile, act_size), lambda i: (i, 0)),
        ),
        compiler_params=pltpu.CompilerParams(
            dimension_semantics=("parallel",)),
        cost_estimate=cost,
    )(x, w1, b1, w2, b2, w3, b3)


def init_model_actor_params(key, obs_size, act_size, hidden_size=64):
    """Deterministic init mimicking nn.Linear default (uniform +/- 1/sqrt(in)).

    Weights are stored transposed, i.e. (in_features, out_features).
    """
    def linear(k, fan_in, fan_out):
        kw, kb = jax.random.split(k)
        bound = 1.0 / (fan_in ** 0.5)
        w = jax.random.uniform(kw, (fan_in, fan_out), jnp.float32,
                               minval=-bound, maxval=bound)
        b = jax.random.uniform(kb, (1, fan_out), jnp.float32,
                               minval=-bound, maxval=bound)
        return w, b

    k1, k2, k3 = jax.random.split(key, 3)
    w1, b1 = linear(k1, obs_size, hidden_size)
    w2, b2 = linear(k2, hidden_size, hidden_size)
    w3, b3 = linear(k3, hidden_size, act_size)
    # logstd = jnp.zeros((act_size,))  # present in the module, unused in forward
    return (w1, b1, w2, b2, w3, b3)


if __name__ == "__main__":
    key = jax.random.PRNGKey(0)
    k_params, k_x = jax.random.split(key)

    batch = 16
    obs_size = 32
    act_size = 8
    hidden_size = 64

    params = init_model_actor_params(k_params, obs_size, act_size, hidden_size)
    x = jax.random.normal(k_x, (batch, obs_size), jnp.float32)

    # pure-JAX f32 reference
    w1, b1, w2, b2, w3, b3 = params
    ref = jnp.tanh(jnp.tanh(jnp.tanh(x @ w1 + b1) @ w2 + b2) @ w3 + b3)

    # f32-MXU path: exact check
    prep_f32 = prepare_model_actor_params(params, matmul_dtype=jnp.float32)
    out_f32 = jax.block_until_ready(model_actor_forward(x, prep_f32))
    assert out_f32.shape == (batch, act_size)
    assert jnp.allclose(out_f32, ref, atol=1e-5, rtol=1e-5)

    # bf16-MXU path (default, fast path on v6e/v7x): loose tolerance
    prep_bf16 = prepare_model_actor_params(params)     # one-time prep, reused
    out_bf16 = jax.block_until_ready(model_actor_forward(x, prep_bf16))
    assert out_bf16.shape == (batch, act_size)
    assert jnp.allclose(out_bf16, ref, atol=5e-2, rtol=5e-2)

    print("KERNEL_OK")
</pallas_src>

<mosaic_0001>
module attributes {stable_mosaic.version = 11 : i64} {
  func.func @actor_mlp_kernel(%arg0: i32, %arg1: memref<16x32xf32, #tpu.memory_space<vmem>>, %arg2: memref<32x128xf32, #tpu.memory_space<vmem>>, %arg3: memref<1x128xf32, #tpu.memory_space<vmem>>, %arg4: memref<128x128xf32, #tpu.memory_space<vmem>>, %arg5: memref<1x128xf32, #tpu.memory_space<vmem>>, %arg6: memref<128x8xf32, #tpu.memory_space<vmem>>, %arg7: memref<1x8xf32, #tpu.memory_space<vmem>>, %arg8: memref<16x8xf32, #tpu.memory_space<vmem>>) attributes {dimension_semantics = [#tpu.dimension_semantics<parallel>], iteration_bounds = array<i64: 1>, scalar_prefetch = 0 : i64, scratch_operands = 0 : i64, tpu.core_type = #tpu.core_type<tc>, window_params = [{transform_indices = @transform_0, window_bounds = array<i64: 16, 32>}, {pipeline_mode = #tpu.pipeline_mode<synchronous>, transform_indices = @transform_1, window_bounds = array<i64: 32, 128>}, {pipeline_mode = #tpu.pipeline_mode<synchronous>, transform_indices = @transform_2, window_bounds = array<i64: 1, 128>}, {pipeline_mode = #tpu.pipeline_mode<synchronous>, transform_indices = @transform_3, window_bounds = array<i64: 128, 128>}, {pipeline_mode = #tpu.pipeline_mode<synchronous>, transform_indices = @transform_4, window_bounds = array<i64: 1, 128>}, {pipeline_mode = #tpu.pipeline_mode<synchronous>, transform_indices = @transform_5, window_bounds = array<i64: 128, 8>}, {pipeline_mode = #tpu.pipeline_mode<synchronous>, transform_indices = @transform_6, window_bounds = array<i64: 1, 8>}, {transform_indices = @transform_7, window_bounds = array<i64: 16, 8>}]} {
    %c0 = arith.constant 0 : index
    %c0_0 = arith.constant 0 : index
    %0 = vector.load %arg1[%c0, %c0_0] : memref<16x32xf32, #tpu.memory_space<vmem>>, vector<16x32xf32>
    %c0_1 = arith.constant 0 : index
    %c0_2 = arith.constant 0 : index
    %1 = vector.load %arg2[%c0_1, %c0_2] : memref<32x128xf32, #tpu.memory_space<vmem>>, vector<32x128xf32>
    %cst = arith.constant dense<0.000000e+00> : vector<16x128xf32>
    %2 = tpu.matmul %0, %1, %cst {dimension_numbers = #tpu.dot_dimension_numbers<[1], [0], [0], [1], [0, 0, 1, 1], [], []>} : vector<16x32xf32>, vector<32x128xf32>, vector<16x128xf32> -> vector<16x128xf32>
    %c0_3 = arith.constant 0 : index
    %c0_4 = arith.constant 0 : index
    %3 = vector.load %arg3[%c0_3, %c0_4] : memref<1x128xf32, #tpu.memory_space<vmem>>, vector<1x128xf32>
    %4 = vector.broadcast %3 : vector<1x128xf32> to vector<16x128xf32>
    %5 = arith.addf %2, %4 : vector<16x128xf32>
    %6 = math.tanh %5 : vector<16x128xf32>
    %c0_5 = arith.constant 0 : index
    %c0_6 = arith.constant 0 : index
    %7 = vector.load %arg4[%c0_5, %c0_6] : memref<128x128xf32, #tpu.memory_space<vmem>>, vector<128x128xf32>
    %cst_7 = arith.constant dense<0.000000e+00> : vector<16x128xf32>
    %8 = tpu.matmul %6, %7, %cst_7 {dimension_numbers = #tpu.dot_dimension_numbers<[1], [0], [0], [1], [0, 0, 1, 1], [], []>} : vector<16x128xf32>, vector<128x128xf32>, vector<16x128xf32> -> vector<16x128xf32>
    %c0_8 = arith.constant 0 : index
    %c0_9 = arith.constant 0 : index
    %9 = vector.load %arg5[%c0_8, %c0_9] : memref<1x128xf32, #tpu.memory_space<vmem>>, vector<1x128xf32>
    %10 = vector.broadcast %9 : vector<1x128xf32> to vector<16x128xf32>
    %11 = arith.addf %8, %10 : vector<16x128xf32>
    %12 = math.tanh %11 : vector<16x128xf32>
    %c0_10 = arith.constant 0 : index
    %c0_11 = arith.constant 0 : index
    %13 = vector.load %arg6[%c0_10, %c0_11] : memref<128x8xf32, #tpu.memory_space<vmem>>, vector<128x8xf32>
    %cst_12 = arith.constant dense<0.000000e+00> : vector<16x8xf32>
    %14 = tpu.matmul %12, %13, %cst_12 {dimension_numbers = #tpu.dot_dimension_numbers<[1], [0], [0], [1], [0, 0, 1, 1], [], []>} : vector<16x128xf32>, vector<128x8xf32>, vector<16x8xf32> -> vector<16x8xf32>
    %c0_13 = arith.constant 0 : index
    %c0_14 = arith.constant 0 : index
    %15 = vector.load %arg7[%c0_13, %c0_14] : memref<1x8xf32, #tpu.memory_space<vmem>>, vector<1x8xf32>
    %16 = vector.broadcast %15 : vector<1x8xf32> to vector<16x8xf32>
    %17 = arith.addf %14, %16 : vector<16x8xf32>
    %18 = math.tanh %17 : vector<16x8xf32>
    %c0_15 = arith.constant 0 : index
    %c0_16 = arith.constant 0 : index
    %19 = vector.load %arg8[%c0_15, %c0_16] : memref<16x8xf32, #tpu.memory_space<vmem>>, vector<16x8xf32>
    tpu.vector_store %arg8[%c0_15, %c0_16], %18 {strides = array<i32>} : memref<16x8xf32, #tpu.memory_space<vmem>>, vector<16x8xf32>,
    return
  }
  func.func @transform_0(%arg0: i32) -> (i32, i32) {
    %c0_i32 = arith.constant 0 : i32
    %c0_i32_0 = arith.constant 0 : i32
    return %arg0, %c0_i32 : i32, i32
  }
  func.func @transform_1(%arg0: i32) -> (i32, i32) {
    %c0_i32 = arith.constant 0 : i32
    %c0_i32_0 = arith.constant 0 : i32
    %c0_i32_1 = arith.constant 0 : i32
    return %c0_i32, %c0_i32_0 : i32, i32
  }
  func.func @transform_2(%arg0: i32) -> (i32, i32) {
    %c0_i32 = arith.constant 0 : i32
    %c0_i32_0 = arith.constant 0 : i32
    %c0_i32_1 = arith.constant 0 : i32
    return %c0_i32, %c0_i32_0 : i32, i32
  }
  func.func @transform_3(%arg0: i32) -> (i32, i32) {
    %c0_i32 = arith.constant 0 : i32
    %c0_i32_0 = arith.constant 0 : i32
    %c0_i32_1 = arith.constant 0 : i32
    return %c0_i32, %c0_i32_0 : i32, i32
  }
  func.func @transform_4(%arg0: i32) -> (i32, i32) {
    %c0_i32 = arith.constant 0 : i32
    %c0_i32_0 = arith.constant 0 : i32
    %c0_i32_1 = arith.constant 0 : i32
    return %c0_i32, %c0_i32_0 : i32, i32
  }
  func.func @transform_5(%arg0: i32) -> (i32, i32) {
    %c0_i32 = arith.constant 0 : i32
    %c0_i32_0 = arith.constant 0 : i32
    %c0_i32_1 = arith.constant 0 : i32
    return %c0_i32, %c0_i32_0 : i32, i32
  }
  func.func @transform_6(%arg0: i32) -> (i32, i32) {
    %c0_i32 = arith.constant 0 : i32
    %c0_i32_0 = arith.constant 0 : i32
    %c0_i32_1 = arith.constant 0 : i32
    return %c0_i32, %c0_i32_0 : i32, i32
  }
  func.func @transform_7(%arg0: i32) -> (i32, i32) {
    %c0_i32 = arith.constant 0 : i32
    %c0_i32_0 = arith.constant 0 : i32
    return %arg0, %c0_i32 : i32, i32
  }
}

</mosaic_0001>

<llo_original>
// kernel: tpu_custom_call.1
$region0: #{tpu_custom_call.1}
  #allocation0 [shape = 'u32[]', space=smem, size = 0x4, offset = 0x4, fixed_abs, tag = 'smem constant byte address 0x4 - core index']
  #allocation1 [shape = 'u32[72,128]{1,0:T(1,128)}', space=vmem, size = 0x9000, scoped, tag = 'internal scratch']
  %s0 = inlined_call_operand.hbm [shape: f32[16,32], index: 0, kind: input, shape index: {}]
  %s1 = inlined_call_operand.hbm [shape: f32[32,128], index: 1, kind: input, shape index: {}]
  %s2 = inlined_call_operand.vmem [shape: f32[1,128], index: 2, kind: input, shape index: {}]
  %s3 = inlined_call_operand.vmem [shape: f32[128,128], index: 3, kind: input, shape index: {}]
  %s4 = inlined_call_operand.vmem [shape: f32[1,128], index: 4, kind: input, shape index: {}]
  %s5 = inlined_call_operand.vmem [shape: f32[128,8], index: 5, kind: input, shape index: {}]
  %s6 = inlined_call_operand.vmem [shape: f32[1,8], index: 6, kind: input, shape index: {}]
  %s7 = inlined_call_operand.vmem [shape: f32[16,8], index: 7, kind: output, shape index: {}]
  %s8 = sld [smem:[#allocation0]]
  $region46: #{tpu_custom_call.1} parent=0
    _
  %s10 = ssub.s32 1, %s8
  %s11 = scalar_select 0, %s10, %s8
  $region1: #{tpu_custom_call.1} parent=0
    #allocation2 [shape = 'u8[8192]{0}', space=vmem, size = 0x2000, scoped, tag = 'input window, operand 0, single buffered']
    #allocation3 [shape = 's32[1]{0}', space=sflag, size = 0x4, scoped, tag = 'scoped memory for tpu_custom_call.1']
    #allocation4 [shape = 'u8[16384]{0}', space=vmem, size = 0x4000, scoped, tag = 'input window, operand 1, single buffered']
    #allocation5 [shape = 's32[1]{0}', space=sflag, size = 0x4, scoped, tag = 'scoped memory for tpu_custom_call.1']
    %12 = vsyncpa [#allocation3], 0
    %13 = vsyncpa [#allocation5], 0
    // Predicated region
    $region2: #{tpu_custom_call.1} parent=1 // pred_check
      _
    $region3: #{tpu_custom_call.1} parent=1 // pred_check_branch
      %15 = sbr.rel (0) target = $region5
    $region4: #{tpu_custom_call.1} parent=1 // pred_region
      %17 = vsyncadd [#allocation3], 0
      %s18 = sshll.u32 %s0, 4
      %s19 = int_to_ptr.hbm [resolvable:$true] %s18
      %s20 = sshll.u32 [#allocation2], 4
      %s21 = int_to_ptr.vmem [resolvable:$true] %s20
      %26 = dma.hbm_to_vmem [thread:$0]  %s19, 256, %s21, [#allocation3], 128, 128, 8
    $region5: #{tpu_custom_call.1} parent=1 // pred_fallthru
      _
    // Predicated region
    $region6: #{tpu_custom_call.1} parent=1 // pred_check
      _
    $region7: #{tpu_custom_call.1} parent=1 // pred_check_branch
      %28 = sbr.rel (0) target = $region9
    $region8: #{tpu_custom_call.1} parent=1 // pred_region
      %30 = vsyncadd [#allocation5], 0
      %s31 = sshll.u32 %s1, 4
      %s32 = int_to_ptr.hbm [resolvable:$true] %s31
      %s33 = sshll.u32 [#allocation4], 4
      %s34 = int_to_ptr.vmem [resolvable:$true] %s33
      %39 = dma.hbm_to_vmem [thread:$0]  %s32, 512, %s34, [#allocation5], 128, 128, 8
    $region9: #{tpu_custom_call.1} parent=1 // pred_fallthru
      _
    // Predicated region
    $region10: #{tpu_custom_call.1} parent=1 // pred_check
      _
    $region11: #{tpu_custom_call.1} parent=1 // pred_check_branch
      %41 = sbr.rel (0) target = $region13
    $region12: #{tpu_custom_call.1} parent=1 // pred_region
      _
    $region13: #{tpu_custom_call.1} parent=1 // pred_fallthru
      _
    // Predicated region
    $region14: #{tpu_custom_call.1} parent=1 // pred_check
      _
    $region15: #{tpu_custom_call.1} parent=1 // pred_check_branch
      %43 = sbr.rel (0) target = $region17
    $region16: #{tpu_custom_call.1} parent=1 // pred_region
      _
    $region17: #{tpu_custom_call.1} parent=1 // pred_fallthru
      _
    // Predicated region
    $region18: #{tpu_custom_call.1} parent=1 // pred_check
      _
    $region19: #{tpu_custom_call.1} parent=1 // pred_check_branch
      %45 = sbr.rel (0) target = $region21
    $region20: #{tpu_custom_call.1} parent=1 // pred_region
      _
    $region21: #{tpu_custom_call.1} parent=1 // pred_fallthru
      _
    // Predicated region
    $region22: #{tpu_custom_call.1} parent=1 // pred_check
      _
    $region23: #{tpu_custom_call.1} parent=1 // pred_check_branch
      %47 = sbr.rel (0) target = $region25
    $region24: #{tpu_custom_call.1} parent=1 // pred_region
      _
    $region25: #{tpu_custom_call.1} parent=1 // pred_fallthru
      _
    // Predicated region
    $region26: #{tpu_custom_call.1} parent=1 // pred_check
      _
    $region27: #{tpu_custom_call.1} parent=1 // pred_check_branch
      %49 = sbr.rel (0) target = $region29
    $region28: #{tpu_custom_call.1} parent=1 // pred_region
      _
    $region29: #{tpu_custom_call.1} parent=1 // pred_fallthru
      _
    // Predicated region
    $region30: #{tpu_custom_call.1} parent=1 // pred_check
      _
    $region31: #{tpu_custom_call.1} parent=1 // pred_check_branch
      %51 = sbr.rel (0) target = $region33
    $region32: #{tpu_custom_call.1} parent=1 // pred_region
      %53 = dma.done [#allocation3], 256
    $region33: #{tpu_custom_call.1} parent=1 // pred_fallthru
      _
    // Predicated region
    $region34: #{tpu_custom_call.1} parent=1 // pred_check
      _
    $region35: #{tpu_custom_call.1} parent=1 // pred_check_branch
      %55 = sbr.rel (0) target = $region37
    $region36: #{tpu_custom_call.1} parent=1 // pred_region
      %57 = dma.done [#allocation5], 512
    $region37: #{tpu_custom_call.1} parent=1 // pred_fallthru
      _
    %v58 = vld [vmem:[#allocation2] sm:$0xff]
    %v59 = vld [vmem:[#allocation2 + $0x8] sm:$0xff]
    %v60 = vld [vmem:[#allocation4] sm:$0xff]
    %v61 = vld [vmem:[#allocation4 + $0x8] sm:$0xff]
    %v62 = vld [vmem:[#allocation4 + $0x10] sm:$0xff]
    %v63 = vld [vmem:[#allocation4 + $0x18] sm:$0xff]
    %v64 = vld [vmem:[%s2] sm:$0x1]
    %v66 = vperm.slane %v64, 0
    %vm68 = vcmask 261120
    %v70 = vsel %vm68, %v58, 0
    %v73 = vsel %vm68, %v59, 0
    %75 = vmatpush.msra.mxu0 0.0
    %76 = vmatpush.msra.mxu0 0.0
    %77 = vmatpush.msra.mxu0 0.0
    %78 = vmatpush.msra.mxu0 0.0
    %79 = vmatpush.msra.mxu0 0.0
    %80 = vmatpush.msra.mxu0 0.0
    %81 = vmatpush.msra.mxu0 0.0
    %82 = vmatpush.msra.mxu0 0.0
    %83 = vmatpush.msra.mxu0 0.0
    %84 = vmatpush.msra.mxu0 0.0
    %85 = vmatpush.msra.mxu0 0.0
    %86 = vmatpush.msra.mxu0 0.0
    %87 = vmatpush.msra.mxu0 %v63
    %88 = vmatpush.msra.mxu0 %v62
    %89 = vmatpush.msra.mxu0 %v61
    %90 = vmatpush.msra.mxu0 %v60
    %91 = vmatmul.f32.gmra.mxu0 %v70
    %v92 = vpop.f32.mrf.mxu0
    %v93 = vadd.f32 %v66, %v92
    %94 = vmatmul.f32.gmra.mxu0 %v73
    %v95 = vpop.f32.mrf.mxu0
    %v96 = vadd.f32 %v66, %v95
    %97 = vdwg.mxu0
    %v98 = vtanh.pop %v93
    %v99 = vtanh.pop %v96
    %v100 = vld [vmem:[%s3] sm:$0xff]
    %v101 = vld [vmem:[%s3 + $0x8] sm:$0xff]
    %v102 = vld [vmem:[%s3 + $0x10] sm:$0xff]
    %v103 = vld [vmem:[%s3 + $0x18] sm:$0xff]
    %v104 = vld [vmem:[%s3 + $0x20] sm:$0xff]
    %v105 = vld [vmem:[%s3 + $0x28] sm:$0xff]
    %v106 = vld [vmem:[%s3 + $0x30] sm:$0xff]
    %v107 = vld [vmem:[%s3 + $0x38] sm:$0xff]
    %v108 = vld [vmem:[%s3 + $0x40] sm:$0xff]
    %v109 = vld [vmem:[%s3 + $0x48] sm:$0xff]
    %v110 = vld [vmem:[%s3 + $0x50] sm:$0xff]
    %v111 = vld [vmem:[%s3 + $0x58] sm:$0xff]
    %v112 = vld [vmem:[%s3 + $0x60] sm:$0xff]
    %v113 = vld [vmem:[%s3 + $0x68] sm:$0xff]
    %v114 = vld [vmem:[%s3 + $0x70] sm:$0xff]
    %v115 = vld [vmem:[%s3 + $0x78] sm:$0xff]
    %v116 = vld [vmem:[%s4] sm:$0x1]
    %v118 = vperm.slane %v116, 0
    %120 = vmatpush.msra.mxu0 %v115
    %121 = vmatpush.msra.mxu0 %v114
    %122 = vmatpush.msra.mxu0 %v113
    %123 = vmatpush.msra.mxu0 %v112
    %124 = vmatpush.msra.mxu0 %v111
    %125 = vmatpush.msra.mxu0 %v110
    %126 = vmatpush.msra.mxu0 %v109
    %127 = vmatpush.msra.mxu0 %v108
    %128 = vmatpush.msra.mxu0 %v107
    %129 = vmatpush.msra.mxu0 %v106
    %130 = vmatpush.msra.mxu0 %v105
    %131 = vmatpush.msra.mxu0 %v104
    %132 = vmatpush.msra.mxu0 %v103
    %133 = vmatpush.msra.mxu0 %v102
    %134 = vmatpush.msra.mxu0 %v101
    %135 = vmatpush.msra.mxu0 %v100
    %136 = vmatmul.f32.gmra.mxu0 %v98
    %v137 = vpop.f32.mrf.mxu0
    %v138 = vadd.f32 %v118, %v137
    %139 = vmatmul.f32.gmra.mxu0 %v99
    %v140 = vpop.f32.mrf.mxu0
    %v141 = vadd.f32 %v118, %v140
    %142 = vdwg.mxu0
    %v143 = vtanh.pop %v138
    %v144 = vtanh.pop %v141
    %v145 = vld [vmem:[%s5] sm:$0xff]
    %v146 = vld [vmem:[%s5 + $0x8] sm:$0xff]
    %v147 = vld [vmem:[%s5 + $0x10] sm:$0xff]
    %v148 = vld [vmem:[%s5 + $0x18] sm:$0xff]
    %v149 = vld [vmem:[%s5 + $0x20] sm:$0xff]
    %v150 = vld [vmem:[%s5 + $0x28] sm:$0xff]
    %v151 = vld [vmem:[%s5 + $0x30] sm:$0xff]
    %v152 = vld [vmem:[%s5 + $0x38] sm:$0xff]
    %v153 = vld [vmem:[%s5 + $0x40] sm:$0xff]
    %v154 = vld [vmem:[%s5 + $0x48] sm:$0xff]
    %v155 = vld [vmem:[%s5 + $0x50] sm:$0xff]
    %v156 = vld [vmem:[%s5 + $0x58] sm:$0xff]
    %v157 = vld [vmem:[%s5 + $0x60] sm:$0xff]
    %v158 = vld [vmem:[%s5 + $0x68] sm:$0xff]
    %v159 = vld [vmem:[%s5 + $0x70] sm:$0xff]
    %v160 = vld [vmem:[%s5 + $0x78] sm:$0xff]
    %v161 = vld [vmem:[%s6] sm:$0x1]
    %v163 = vperm.slane %v161, 0
    %165 = vmatpush.msra.mxu0 %v160
    %166 = vmatpush.msra.mxu0 %v159
    %167 = vmatpush.msra.mxu0 %v158
    %168 = vmatpush.msra.mxu0 %v157
    %169 = vmatpush.msra.mxu0 %v156
    %170 = vmatpush.msra.mxu0 %v155
    %171 = vmatpush.msra.mxu0 %v154
    %172 = vmatpush.msra.mxu0 %v153
    %173 = vmatpush.msra.mxu0 %v152
    %174 = vmatpush.msra.mxu0 %v151
    %175 = vmatpush.msra.mxu0 %v150
    %176 = vmatpush.msra.mxu0 %v149
    %177 = vmatpush.msra.mxu0 %v148
    %178 = vmatpush.msra.mxu0 %v147
    %179 = vmatpush.msra.mxu0 %v146
    %180 = vmatpush.msra.mxu0 %v145
    %181 = vmatmul.f32.gmra.mxu0 %v143
    %v182 = vpop.f32.mrf.mxu0
    %v183 = vadd.f32 %v163, %v182
    %184 = vmatmul.f32.gmra.mxu0 %v144
    %v185 = vpop.f32.mrf.mxu0
    %v186 = vadd.f32 %v163, %v185
    %187 = vdwg.mxu0
    %v188 = vtanh.pop %v183
    %v189 = vtanh.pop %v186
    %vm190 = vcmask 64512
    %191 = vst.msk [vmem:[%s7] sm:$0xff] %vm190, %v188
    %192 = vst.msk [vmem:[%s7 + $0x8] sm:$0xff] %vm190, %v189
    // Predicated region
    $region38: #{tpu_custom_call.1} parent=1 // pred_check
      _
    $region39: #{tpu_custom_call.1} parent=1 // pred_check_branch
      %194 = sbr.rel (0) target = $region41
    $region40: #{tpu_custom_call.1} parent=1 // pred_region
      _
    $region41: #{tpu_custom_call.1} parent=1 // pred_fallthru
      _
    // Predicated region
    $region42: #{tpu_custom_call.1} parent=1 // pred_check
      _
    $region43: #{tpu_custom_call.1} parent=1 // pred_check_branch
      %196 = sbr.rel (0) target = $region45
    $region44: #{tpu_custom_call.1} parent=1 // pred_region
      _
    $region45: #{tpu_custom_call.1} parent=1 // pred_fallthru
      _
    %197 = vsyncpa [#allocation3], 1
    %198 = vsyncpa [#allocation5], 1

</llo_original>
